<compile_context>
chip_gen: v5e
topology: v5e:2x2
jax: 0.10.0
libtpu: 0.0.40
codegen_flags: <defaults>
</compile_context>

<pallas_src>
import numpy as np
import jax
import jax.numpy as jnp
from jax.experimental import pallas as pl
from jax.experimental.pallas import tpu as pltpu

# ----------------------------------------------------------------------------
# Synthetic "preproc_params" (deterministic, mirrors gamma_cnn.__init__)
# ----------------------------------------------------------------------------
GAMMA = 1.0 / 2.2
HIDDEN_CHANNELS = 8          # hidden_channels
INPUT_CHANNELS = 4           # input_channels (RGGB)
RGGB_MAX = 1023.0            # scalar sensor max


def make_cnn_gamma(gamma, hidden_channels, input_channels):
    """Exact reimplementation of gamma_cnn.make_cnn_gamma (numpy)."""
    bias = np.linspace(0.0, 1.0, hidden_channels + 1)
    bias = bias ** 2
    weights = np.zeros(hidden_channels)
    for i in range(hidden_channels):
        w = (bias[i + 1] ** gamma - bias[i] ** gamma) / (bias[i + 1] - bias[i]) \
            - np.sum(weights)
        weights[i] = w
    # cnn2 weight, laid out (C, hidden) -- same values as the (C, hidden, 1, 1)
    # torch Parameter, with the trailing 1x1 kernel dims dropped.
    w2 = np.tile(weights, (input_channels, 1)).astype(np.float32)
    # cnn1 bias, flat (C*hidden,) == concat of (-knots) per channel group
    b1 = (np.concatenate([bias[:-1]] * input_channels) * -1.0).astype(np.float32)
    return w2, b1


# ----------------------------------------------------------------------------
# Pallas kernel
# ----------------------------------------------------------------------------
_MAX_TILE_ELEMS = 512 * 1024   # 2 MiB f32/tile; ~8 MiB live with in+out double buffers


def _gamma_pwl_kernel(x_ref, o_ref, *, knots, cum_slopes, cum_icepts):
    """Piecewise-linear gamma on one (tile_rows, lanes) f32 tile.

    y = relu(slope_k * x + icept_k) where k = #{h : x >= knots[h]} - 1.
    Segment selection via a static-unrolled compare/select chain:
      (H-1) cmp + 2*(H-1) select + 1 mul + 1 add + 1 max  (~24 VALU ops for H=8)
    instead of the ~33-op ReLU-basis sum.  x < knots[0]=0 falls into segment 0
    and the final relu clamps it to 0, matching the reference exactly.
    """
    x = x_ref[...]                                   # (tile_rows, lanes) f32
    slope = cum_slopes[0]
    icept = cum_icepts[0]
    for h in range(1, len(knots)):                   # static unroll over segments
        in_seg = x >= knots[h]
        slope = jnp.where(in_seg, cum_slopes[h], slope)
        icept = jnp.where(in_seg, cum_icepts[h], icept)
    o_ref[...] = jnp.maximum(slope * x + icept, 0.0)  # final ReLU of cnn2


def _choose_layout(total):
    """Pick a lane width that lets us reshape the flat tensor with NO padding."""
    for lanes in (512, 256, 128):
        if total % (8 * lanes) == 0:
            return lanes, total // lanes, 0
    # Ragged fallback: minimal pad to an (8k, 128) slab.
    # TODO(synk): this path still costs a full pad + slice HBM pass; it is only
    # hit when N*C*H*W is not a multiple of 1024 (never for real RGGB frames).
    lanes = 128
    rows = pl.cdiv(total, 8 * lanes) * 8
    return lanes, rows, rows * lanes - total


def _pick_tile_rows(rows, lanes):
    """Tile rows: <= 2 MiB/tile, multiple of 8, >= 2 grid blocks when possible."""
    max_tile_rows = max(8, _MAX_TILE_ELEMS // lanes)
    if rows <= max_tile_rows:
        if rows >= 16 and rows % 16 == 0:
            return rows // 2          # 2 parallel blocks -> both v7x TensorCores
        return rows                   # single block == full extent (allowed)
    return max_tile_rows              # grid >= 2; partial last block handled by Pallas


def gamma_cnn_forward(x_nchw, w2, b1, rggb_max):
    """x_nchw: (N, C, H, W) float32 -> (N, C, H, W) float32."""
    N, C, H, W = x_nchw.shape
    hidden = w2.shape[1]
    total = N * C * H * W

    # The module's init produces identical params for every channel group, so
    # the grouped 1x1 convs collapse to one per-pixel piecewise-linear curve.
    # TODO(synk): trained (channel-distinct) params would need an (8, hidden)
    # sublane-cycled parameter table instead of baked scalar constants.
    w2_np = np.asarray(w2, dtype=np.float64)
    b1_np = np.asarray(b1, dtype=np.float64).reshape(C, hidden)
    assert np.allclose(w2_np, w2_np[:1]) and np.allclose(b1_np, b1_np[:1]), (
        "kernel assumes channel-uniform gamma params (true for gamma_cnn init)")

    # Fold x/rggb_max into the params:  w*relu(x/r + b) == (w/r)*relu(x + b*r),
    # then convert the ReLU basis into cumulative slope/intercept per segment:
    #   for knot[k] <= x < knot[k+1]:  y = (sum_{h<=k} s_h) * x + sum_{h<=k} s_h*b_h
    rmax = float(rggb_max)
    scales = w2_np[0] / rmax                    # (hidden,)  w/r
    shifts = b1_np[0] * rmax                    # (hidden,)  b*r  (== -knots)
    knots = tuple(np.float32(-s) for s in shifts)
    cum_slopes = tuple(np.float32(v) for v in np.cumsum(scales))
    cum_icepts = tuple(np.float32(v) for v in np.cumsum(scales * shifts))

    # Lane/sublane-dense (rows, lanes) slab; no pad/copy in the common case.
    lanes, rows, pad = _choose_layout(total)
    tile_rows = _pick_tile_rows(rows, lanes)
    grid = pl.cdiv(rows, tile_rows)

    if pad == 0:
        x2d = x_nchw.reshape(rows, lanes)       # free: contiguous reshape only
    else:
        x2d = jnp.pad(x_nchw.reshape(-1), (0, pad)).reshape(rows, lanes)

    kernel = lambda xr, orf: _gamma_pwl_kernel(
        xr, orf, knots=knots, cum_slopes=cum_slopes, cum_icepts=cum_icepts)

    out2d = pl.pallas_call(
        kernel,
        out_shape=jax.ShapeDtypeStruct((rows, lanes), jnp.float32),
        grid_spec=pltpu.PrefetchScalarGridSpec(
            num_scalar_prefetch=0,
            grid=(grid,),
            in_specs=[pl.BlockSpec((tile_rows, lanes), lambda i: (i, 0))],
            out_specs=pl.BlockSpec((tile_rows, lanes), lambda i: (i, 0)),
        ),
        compiler_params=pltpu.CompilerParams(
            dimension_semantics=("parallel",)),
    )(x2d)

    if pad == 0:
        return out2d.reshape(N, C, H, W)        # free: contiguous reshape only
    return out2d.reshape(-1)[:total].reshape(N, C, H, W)


# Pure-JAX reference (mirrors the PyTorch forward) for a sanity check.
def gamma_cnn_reference(x_nchw, w2, b1, rggb_max):
    N, C, H, W = x_nchw.shape
    hidden = w2.shape[1]
    xn = x_nchw / rggb_max
    knots = b1.reshape(C, hidden)                      # already negated knots
    hid = jnp.maximum(xn[:, :, None, :, :] + knots[None, :, :, None, None], 0.0)
    out = jnp.einsum("nchxy,ch->ncxy", hid, w2)
    return jnp.maximum(out, 0.0)


if __name__ == "__main__":
    key = jax.random.PRNGKey(0)
    w2_np, b1_np = make_cnn_gamma(GAMMA, HIDDEN_CHANNELS, INPUT_CHANNELS)
    w2 = jnp.asarray(w2_np)
    b1 = jnp.asarray(b1_np)

    # Small test case (single-block path).
    k1, k2 = jax.random.split(key)
    x = jax.random.uniform(k1, (2, INPUT_CHANNELS, 16, 16), dtype=jnp.float32,
                           minval=0.0, maxval=RGGB_MAX)
    y = jax.block_until_ready(gamma_cnn_forward(x, w2, b1, RGGB_MAX))
    y_ref = gamma_cnn_reference(x, w2, b1, RGGB_MAX)
    np.testing.assert_allclose(np.asarray(y), np.asarray(y_ref),
                               rtol=5e-5, atol=1e-5)

    # Slightly larger case exercising the 2-block (dual-TensorCore) path.
    x2 = jax.random.uniform(k2, (2, INPUT_CHANNELS, 64, 64), dtype=jnp.float32,
                            minval=0.0, maxval=RGGB_MAX)
    y2 = jax.block_until_ready(gamma_cnn_forward(x2, w2, b1, RGGB_MAX))
    y2_ref = gamma_cnn_reference(x2, w2, b1, RGGB_MAX)
    np.testing.assert_allclose(np.asarray(y2), np.asarray(y2_ref),
                               rtol=5e-5, atol=1e-5)

    print("KERNEL_OK")
</pallas_src>

<mosaic_0001>
module attributes {stable_mosaic.version = 11 : i64} {
  func.func @_lambda_(%arg0: i32, %arg1: memref<8x256xf32, #tpu.memory_space<vmem>>, %arg2: memref<8x256xf32, #tpu.memory_space<vmem>>) attributes {dimension_semantics = [#tpu.dimension_semantics<parallel>], iteration_bounds = array<i64: 1>, scalar_prefetch = 0 : i64, scratch_operands = 0 : i64, tpu.core_type = #tpu.core_type<tc>, window_params = [{transform_indices = @transform_0, window_bounds = array<i64: 8, 256>}, {transform_indices = @transform_1, window_bounds = array<i64: 8, 256>}]} {
    %c0 = arith.constant 0 : index
    %c0_0 = arith.constant 0 : index
    %0 = vector.load %arg1[%c0, %c0_0] : memref<8x256xf32, #tpu.memory_space<vmem>>, vector<8x256xf32>
    %cst = arith.constant 15.984375 : f32
    %1 = vector.broadcast %cst : f32 to vector<8x256xf32>
    %2 = arith.cmpf oge, %0, %1 : vector<8x256xf32>
    %cst_1 = arith.constant 0.00276451115 : f32
    %cst_2 = arith.constant 0.00944742467 : f32
    %3 = vector.broadcast %cst_1 : f32 to vector<8x256xf32>
    %4 = vector.broadcast %cst_2 : f32 to vector<8x256xf32>
    %5 = arith.select %2, %3, %4 : vector<8x256xi1>, vector<8x256xf32>
    %cst_3 = arith.constant 0.1068222 : f32
    %cst_4 = arith.constant -0.000000e+00 : f32
    %6 = vector.broadcast %cst_3 : f32 to vector<8x256xf32>
    %7 = vector.broadcast %cst_4 : f32 to vector<8x256xf32>
    %8 = arith.select %2, %6, %7 : vector<8x256xi1>, vector<8x256xf32>
    %cst_5 = arith.constant 6.393750e+01 : f32
    %9 = vector.broadcast %cst_5 : f32 to vector<8x256xf32>
    %10 = arith.cmpf oge, %0, %9 : vector<8x256xf32>
    %cst_6 = arith.constant 0.0015814855 : f32
    %11 = vector.broadcast %cst_6 : f32 to vector<8x256xf32>
    %12 = arith.select %10, %11, %5 : vector<8x256xi1>, vector<8x256xf32>
    %cst_7 = arith.constant 0.182461902 : f32
    %13 = vector.broadcast %cst_7 : f32 to vector<8x256xf32>
    %14 = arith.select %10, %13, %8 : vector<8x256xi1>, vector<8x256xf32>
    %cst_8 = arith.constant 143.859375 : f32
    %15 = vector.broadcast %cst_8 : f32 to vector<8x256xf32>
    %16 = arith.cmpf oge, %0, %15 : vector<8x256xf32>
    %cst_9 = arith.constant 0.00109524035 : f32
    %17 = vector.broadcast %cst_9 : f32 to vector<8x256xf32>
    %18 = arith.select %16, %17, %12 : vector<8x256xi1>, vector<8x256xf32>
    %cst_10 = arith.constant 0.252412826 : f32
    %19 = vector.broadcast %cst_10 : f32 to vector<8x256xf32>
    %20 = arith.select %16, %19, %14 : vector<8x256xi1>, vector<8x256xf32>
    %cst_11 = arith.constant 2.557500e+02 : f32
    %21 = vector.broadcast %cst_11 : f32 to vector<8x256xf32>
    %22 = arith.cmpf oge, %0, %21 : vector<8x256xf32>
    %cst_12 = arith.constant 8.32500111E-4 : f32
    %23 = vector.broadcast %cst_12 : f32 to vector<8x256xf32>
    %24 = arith.select %22, %23, %18 : vector<8x256xi1>, vector<8x256xf32>
    %cst_13 = arith.constant 0.319608659 : f32
    %25 = vector.broadcast %cst_13 : f32 to vector<8x256xf32>
    %26 = arith.select %22, %25, %20 : vector<8x256xi1>, vector<8x256xf32>
    %cst_14 = arith.constant 399.609375 : f32
    %27 = vector.broadcast %cst_14 : f32 to vector<8x256xf32>
    %28 = arith.cmpf oge, %0, %27 : vector<8x256xf32>
    %cst_15 = arith.constant 6.68777851E-4 : f32
    %29 = vector.broadcast %cst_15 : f32 to vector<8x256xf32>
    %30 = arith.select %28, %29, %24 : vector<8x256xi1>, vector<8x256xf32>
    %cst_16 = arith.constant 0.385033607 : f32
    %31 = vector.broadcast %cst_16 : f32 to vector<8x256xf32>
    %32 = arith.select %28, %31, %26 : vector<8x256xi1>, vector<8x256xf32>
    %cst_17 = arith.constant 575.4375 : f32
    %33 = vector.broadcast %cst_17 : f32 to vector<8x256xf32>
    %34 = arith.cmpf oge, %0, %33 : vector<8x256xf32>
    %cst_18 = arith.constant 5.57338179E-4 : f32
    %35 = vector.broadcast %cst_18 : f32 to vector<8x256xf32>
    %36 = arith.select %34, %35, %30 : vector<8x256xi1>, vector<8x256xf32>
    %cst_19 = arith.constant 0.449160188 : f32
    %37 = vector.broadcast %cst_19 : f32 to vector<8x256xf32>
    %38 = arith.select %34, %37, %32 : vector<8x256xi1>, vector<8x256xf32>
    %cst_20 = arith.constant 783.234375 : f32
    %39 = vector.broadcast %cst_20 : f32 to vector<8x256xf32>
    %40 = arith.cmpf oge, %0, %39 : vector<8x256xf32>
    %cst_21 = arith.constant 4.76771704E-4 : f32
    %41 = vector.broadcast %cst_21 : f32 to vector<8x256xf32>
    %42 = arith.select %40, %41, %36 : vector<8x256xi1>, vector<8x256xf32>
    %cst_22 = arith.constant 0.512262583 : f32
    %43 = vector.broadcast %cst_22 : f32 to vector<8x256xf32>
    %44 = arith.select %40, %43, %38 : vector<8x256xi1>, vector<8x256xf32>
    %45 = arith.mulf %42, %0 : vector<8x256xf32>
    %46 = arith.addf %45, %44 : vector<8x256xf32>
    %cst_23 = arith.constant 0.000000e+00 : f32
    %47 = vector.broadcast %cst_23 : f32 to vector<8x256xf32>
    %48 = arith.maximumf %46, %47 : vector<8x256xf32>
    %c0_24 = arith.constant 0 : index
    %c0_25 = arith.constant 0 : index
    %49 = vector.load %arg2[%c0_24, %c0_25] : memref<8x256xf32, #tpu.memory_space<vmem>>, vector<8x256xf32>
    tpu.vector_store %arg2[%c0_24, %c0_25], %48 {strides = array<i32>} : memref<8x256xf32, #tpu.memory_space<vmem>>, vector<8x256xf32>,
    return
  }
  func.func @transform_0(%arg0: i32) -> (i32, i32) {
    %c0_i32 = arith.constant 0 : i32
    %c0_i32_0 = arith.constant 0 : i32
    return %arg0, %c0_i32 : i32, i32
  }
  func.func @transform_1(%arg0: i32) -> (i32, i32) {
    %c0_i32 = arith.constant 0 : i32
    %c0_i32_0 = arith.constant 0 : i32
    return %arg0, %c0_i32 : i32, i32
  }
}

</mosaic_0001>

<llo_original>
// kernel: tpu_custom_call.1
$region0: #{tpu_custom_call.1}
  #allocation0 [shape = 'u32[]', space=smem, size = 0x4, offset = 0x4, fixed_abs, tag = 'smem constant byte address 0x4 - core index']
  #allocation1 [shape = 'u32[72,128]{1,0:T(1,128)}', space=vmem, size = 0x9000, scoped, tag = 'internal scratch']
  %s0 = inlined_call_operand.hbm [shape: f32[8,256], index: 0, kind: input, shape index: {}]
  %s1 = inlined_call_operand.hbm [shape: f32[8,256], index: 1, kind: output, shape index: {}]
  %s2 = sld [smem:[#allocation0]]
  $region18: #{tpu_custom_call.1} parent=0
    _
  %s4 = ssub.s32 1, %s2
  %s5 = scalar_select 0, %s4, %s2
  $region1: #{tpu_custom_call.1} parent=0
    #allocation2 [shape = 'u8[8192]{0}', space=vmem, size = 0x2000, scoped, tag = 'input window, operand 0, single buffered']
    #allocation3 [shape = 's32[1]{0}', space=sflag, size = 0x4, scoped, tag = 'scoped memory for tpu_custom_call.1']
    #allocation4 [shape = 's32[1]{0}', space=sflag, size = 0x4, scoped, tag = 'scoped memory for tpu_custom_call.1']
    #allocation5 [shape = 'u8[8192]{0}', space=vmem, size = 0x2000, scoped, tag = 'output window, operand 0, single buffered']
    %6 = vsyncpa [#allocation3], 0
    %7 = vsyncpa [#allocation4], 0
    // Predicated region
    $region2: #{tpu_custom_call.1} parent=1 // pred_check
      _
    $region3: #{tpu_custom_call.1} parent=1 // pred_check_branch
      %9 = sbr.rel (0) target = $region5
    $region4: #{tpu_custom_call.1} parent=1 // pred_region
      %11 = vsyncadd [#allocation3], 0
      %s13 = sshll.u32 %s0, 4
      %s14 = int_to_ptr.hbm [resolvable:$true] %s13
      %s15 = sshll.u32 [#allocation2], 4
      %s16 = int_to_ptr.vmem [resolvable:$true] %s15
      %18 = dma.hbm_to_vmem [thread:$0]  %s14, 256, %s16, [#allocation3]
    $region5: #{tpu_custom_call.1} parent=1 // pred_fallthru
      _
    // Predicated region
    $region6: #{tpu_custom_call.1} parent=1 // pred_check
      _
    $region7: #{tpu_custom_call.1} parent=1 // pred_check_branch
      %20 = sbr.rel (0) target = $region9
    $region8: #{tpu_custom_call.1} parent=1 // pred_region
      %22 = dma.done [#allocation3], 256
    $region9: #{tpu_custom_call.1} parent=1 // pred_fallthru
      _
    %v23 = vld [vmem:[#allocation2] sm:$0xff]
    %v24 = vld [vmem:[#allocation2 + $0x8] sm:$0xff]
    %vm25 = vcmp.ge.f32.partialorder %v23, 15.984375
    %vm26 = vcmp.ge.f32.partialorder %v24, 15.984375
    %v27 = vsel %vm25, 0.0027645112, 0.009447425
    %v28 = vsel %vm26, 0.0027645112, 0.009447425
    %v29 = vsel %vm25, 0.1068222, -0.0
    %v30 = vsel %vm26, 0.1068222, -0.0
    %vm31 = vcmp.ge.f32.partialorder %v23, 63.9375
    %vm32 = vcmp.ge.f32.partialorder %v24, 63.9375
    %v33 = vsel %vm31, 0.0015814855, %v27
    %v34 = vsel %vm32, 0.0015814855, %v28
    %v35 = vsel %vm31, 0.1824619, %v29
    %v36 = vsel %vm32, 0.1824619, %v30
    %vm37 = vcmp.ge.f32.partialorder %v23, 143.85938
    %vm38 = vcmp.ge.f32.partialorder %v24, 143.85938
    %v39 = vsel %vm37, 0.0010952404, %v33
    %v40 = vsel %vm38, 0.0010952404, %v34
    %v41 = vsel %vm37, 0.25241283, %v35
    %v42 = vsel %vm38, 0.25241283, %v36
    %vm43 = vcmp.ge.f32.partialorder %v23, 255.75
    %vm44 = vcmp.ge.f32.partialorder %v24, 255.75
    %v45 = vsel %vm43, 0.0008325001, %v39
    %v46 = vsel %vm44, 0.0008325001, %v40
    %v47 = vsel %vm43, 0.31960866, %v41
    %v48 = vsel %vm44, 0.31960866, %v42
    %vm49 = vcmp.ge.f32.partialorder %v23, 399.60938
    %vm50 = vcmp.ge.f32.partialorder %v24, 399.60938
    %v51 = vsel %vm49, 0.00066877785, %v45
    %v52 = vsel %vm50, 0.00066877785, %v46
    %v53 = vsel %vm49, 0.3850336, %v47
    %v54 = vsel %vm50, 0.3850336, %v48
    %vm55 = vcmp.ge.f32.partialorder %v23, 575.4375
    %vm56 = vcmp.ge.f32.partialorder %v24, 575.4375
    %v57 = vsel %vm55, 0.0005573382, %v51
    %v58 = vsel %vm56, 0.0005573382, %v52
    %v59 = vsel %vm55, 0.4491602, %v53
    %v60 = vsel %vm56, 0.4491602, %v54
    %vm61 = vcmp.ge.f32.partialorder %v23, 783.2344
    %vm62 = vcmp.ge.f32.partialorder %v24, 783.2344
    %v63 = vsel %vm61, 0.0004767717, %v57
    %v64 = vsel %vm62, 0.0004767717, %v58
    %v65 = vsel %vm61, 0.5122626, %v59
    %v66 = vsel %vm62, 0.5122626, %v60
    %v67 = vmul.f32 %v63, %v23
    %v68 = vmul.f32 %v64, %v24
    %v69 = vadd.f32 %v67, %v65
    %v70 = vadd.f32 %v68, %v66
    %v71 = vmax.f32 %v69, 0.0
    %v72 = vmax.f32 %v70, 0.0
    %73 = vst [vmem:[#allocation5] sm:$0xff] %v71
    %74 = vst [vmem:[#allocation5 + $0x8] sm:$0xff] %v72
    // Predicated region
    $region10: #{tpu_custom_call.1} parent=1 // pred_check
      _
    $region11: #{tpu_custom_call.1} parent=1 // pred_check_branch
      %76 = sbr.rel (0) target = $region13
    $region12: #{tpu_custom_call.1} parent=1 // pred_region
      %78 = vsyncadd [#allocation4], 0
      %s80 = sshll.u32 [#allocation5], 4
      %s81 = int_to_ptr.vmem [resolvable:$true] %s80
      %s82 = sshll.u32 %s1, 4
      %s83 = int_to_ptr.hbm [resolvable:$true] %s82
      %85 = dma.vmem_to_hbm [thread:$0]  %s81, 256, %s83, [#allocation4]
    $region13: #{tpu_custom_call.1} parent=1 // pred_fallthru
      _
    // Predicated region
    $region14: #{tpu_custom_call.1} parent=1 // pred_check
      _
    $region15: #{tpu_custom_call.1} parent=1 // pred_check_branch
      %87 = sbr.rel (0) target = $region17
    $region16: #{tpu_custom_call.1} parent=1 // pred_region
      %89 = dma.done [#allocation4], 256
    $region17: #{tpu_custom_call.1} parent=1 // pred_fallthru
      _
    %90 = vsyncpa [#allocation3], 1
    %91 = vsyncpa [#allocation4], 1

</llo_original>
